<compile_context>
chip_gen: v7x
topology: tpu7x:2x2x1
jax: 0.10.0
libtpu: 0.0.40
codegen_flags: <defaults>
</compile_context>

<pallas_src>
import functools

import jax
import jax.numpy as jnp
from jax.experimental import pallas as pl
from jax.experimental.pallas import tpu as pltpu  # noqa: F401  (TPU backend import)

# ---- problem sizes (small, consistent with the module) ----
B = 16        # batch
S = 8         # sequence length
H = 128       # hidden / pooler width (matches nn.Linear(128, emb_size) input)
E = 32        # args.emb_size (mlp output width)
VOCAB = 100   # synthetic vocab size
LANE = 128    # TPU lane width
SUBLANE = 8   # TPU sublane width


def _round_up(x, m):
    return (x + m - 1) // m * m


def tegl_kernel(ids_ref, emb_ref, wp_ref, bp_ref, wm_ref, bm_ref, o_ref):
    """Single-step kernel over the whole (padded) batch.

    ids_ref: [TB, S]  int32 token ids
    emb_ref: [Vp, H]  bf16 embedding table (vocab padded to 128 lanes)
    wp_ref : [H, H]   bf16 pooler weight ([in, out])
    bp_ref : [1, H]   f32  pooler bias
    wm_ref : [H, Ep]  bf16 mlp weight (output padded to 128 lanes)
    bm_ref : [1, Ep]  f32  mlp bias (padded)
    o_ref  : [TB, Ep] f32  output (lane-dense, sliced to E in the wrapper)
    """
    tb, seq = ids_ref.shape
    vp, _ = emb_ref.shape

    ids = ids_ref[...]                                              # [TB, S] int32
    vocab_iota = jax.lax.broadcasted_iota(jnp.int32, (tb, vp), 1)   # [TB, Vp]

    # Per-row token-count matrix: counts[b, v] = #times token v appears in row b.
    # Integer-valued (<= S), so bf16 accumulation is exact.  Built with a static
    # lane slice + VPU compare/add only (no XLU lane reduces, no relayouts).
    counts = jnp.zeros((tb, vp), jnp.bfloat16)
    for s in range(seq):                       # static unroll; seq is small
        id_s = ids[:, s:s + 1]                 # [TB, 1] static column slice
        counts = counts + (vocab_iota == id_s).astype(jnp.bfloat16)

    # Embedding gather + sequence sum fused into a single MXU matmul; the 1/S
    # mean is applied to the narrow [TB, H] f32 result (exact regardless of S).
    h_mean = jnp.dot(counts, emb_ref[...],
                     preferred_element_type=jnp.float32) * (1.0 / seq)   # [TB, H] f32

    # BERT-style pooler head: Linear(H -> H) + tanh (bias/tanh stay f32).
    pooled = jnp.tanh(
        jnp.dot(h_mean.astype(wp_ref.dtype), wp_ref[...],
                preferred_element_type=jnp.float32) + bp_ref[...])       # [TB, H] f32

    # self.mlp: Linear(128 -> emb_size), output padded to 128 lanes (lane-dense vst).
    out = jnp.dot(pooled.astype(wm_ref.dtype), wm_ref[...],
                  preferred_element_type=jnp.float32) + bm_ref[...]      # [TB, Ep] f32

    o_ref[...] = out.astype(o_ref.dtype)


@functools.partial(jax.jit, static_argnames=("emb_size",))
def tegl_forward(src, emb_pad, w_pool, b_pool, w_mlp_pad, b_mlp_pad, *, emb_size):
    """src: int32 [B, S] token ids -> f: [B, emb_size] float32."""
    b, s = src.shape
    vp, h = emb_pad.shape
    ep = w_mlp_pad.shape[1]

    bp = _round_up(b, SUBLANE)
    if bp != b:
        src = jnp.pad(src, ((0, bp - b), (0, 0)))

    out = pl.pallas_call(
        tegl_kernel,
        out_shape=jax.ShapeDtypeStruct((bp, ep), jnp.float32),
        grid=(1,),                                          # single latency-optimal step
        in_specs=[
            pl.BlockSpec((bp, s), lambda i: (0, 0)),        # token ids (whole batch)
            pl.BlockSpec((vp, h), lambda i: (0, 0)),        # embedding table
            pl.BlockSpec((h, h), lambda i: (0, 0)),         # pooler weight
            pl.BlockSpec((1, h), lambda i: (0, 0)),         # pooler bias
            pl.BlockSpec((h, ep), lambda i: (0, 0)),        # mlp weight (lane-padded)
            pl.BlockSpec((1, ep), lambda i: (0, 0)),        # mlp bias (lane-padded)
        ],
        out_specs=pl.BlockSpec((bp, ep), lambda i: (0, 0)),
    )(src, emb_pad, w_pool, b_pool, w_mlp_pad, b_mlp_pad)

    return out[:b, :emb_size]


def init_params(key, vocab=VOCAB, hidden=H, emb_size=E):
    k_emb, k_wp, k_bp, k_wm, k_bm = jax.random.split(key, 5)
    vp = _round_up(vocab, LANE)
    ep = _round_up(emb_size, LANE)

    # frozen synthetic "model" parameters
    emb = jax.random.normal(k_emb, (vocab, hidden), jnp.float32) * 0.02
    w_pool = jax.random.normal(k_wp, (hidden, hidden), jnp.float32) * (1.0 / jnp.sqrt(float(hidden)))
    b_pool = jax.random.normal(k_bp, (1, hidden), jnp.float32) * 0.01
    # trainable self.mlp = Linear(128, emb_size), stored as [in, out]
    w_mlp = jax.random.normal(k_wm, (hidden, emb_size), jnp.float32) * (1.0 / jnp.sqrt(float(hidden)))
    b_mlp = jax.random.normal(k_bm, (1, emb_size), jnp.float32) * 0.01

    # bf16 storage for MXU operands; zero-pad vocab / output to 128 lanes (one-time).
    emb_pad = jnp.zeros((vp, hidden), jnp.bfloat16).at[:vocab].set(emb.astype(jnp.bfloat16))
    w_pool_bf = w_pool.astype(jnp.bfloat16)
    w_mlp_pad = jnp.zeros((hidden, ep), jnp.bfloat16).at[:, :emb_size].set(w_mlp.astype(jnp.bfloat16))
    b_mlp_pad = jnp.zeros((1, ep), jnp.float32).at[:, :emb_size].set(b_mlp)
    return emb_pad, w_pool_bf, b_pool, w_mlp_pad, b_mlp_pad


if __name__ == "__main__":
    key = jax.random.PRNGKey(0)
    k_params, k_src = jax.random.split(key)
    emb_pad, w_pool, b_pool, w_mlp_pad, b_mlp_pad = init_params(k_params)

    # src: integer token ids [B, S]
    src = jax.random.randint(k_src, (B, S), 0, VOCAB, dtype=jnp.int32)

    f = tegl_forward(src, emb_pad, w_pool, b_pool, w_mlp_pad, b_mlp_pad, emb_size=E)
    f = jax.block_until_ready(f)

    # pure-JAX reference of the same computation (same bf16/f32 precision pipeline)
    emb_f = emb_pad.astype(jnp.float32)
    tok = emb_f[src]                                       # [B, S, H]
    h_ref = jnp.sum(tok, axis=1) * (1.0 / S)               # [B, H] f32 (mean)
    pooled_ref = jnp.tanh(
        jnp.dot(h_ref.astype(jnp.bfloat16), w_pool,
                preferred_element_type=jnp.float32) + b_pool)
    ref = (jnp.dot(pooled_ref.astype(jnp.bfloat16), w_mlp_pad,
                   preferred_element_type=jnp.float32) + b_mlp_pad)[:, :E]

    assert f.shape == (B, E)
    assert jnp.allclose(f, ref, atol=1e-3, rtol=1e-3)

    print("KERNEL_OK")
</pallas_src>

<mosaic_0001>
module attributes {stable_mosaic.version = 11 : i64} {
  func.func @tegl_kernel(%arg0: i32, %arg1: memref<16x8xi32, #tpu.memory_space<vmem>>, %arg2: memref<128x128xbf16, #tpu.memory_space<vmem>>, %arg3: memref<128x128xbf16, #tpu.memory_space<vmem>>, %arg4: memref<1x128xf32, #tpu.memory_space<vmem>>, %arg5: memref<128x128xbf16, #tpu.memory_space<vmem>>, %arg6: memref<1x128xf32, #tpu.memory_space<vmem>>, %arg7: memref<16x128xf32, #tpu.memory_space<vmem>>) attributes {dimension_semantics = [#tpu.dimension_semantics<arbitrary>], iteration_bounds = array<i64: 1>, scalar_prefetch = 0 : i64, scratch_operands = 0 : i64, tpu.core_type = #tpu.core_type<tc>, window_params = [{pipeline_mode = #tpu.pipeline_mode<synchronous>, transform_indices = @transform_0, window_bounds = array<i64: 16, 8>}, {pipeline_mode = #tpu.pipeline_mode<synchronous>, transform_indices = @transform_1, window_bounds = array<i64: 128, 128>}, {pipeline_mode = #tpu.pipeline_mode<synchronous>, transform_indices = @transform_2, window_bounds = array<i64: 128, 128>}, {pipeline_mode = #tpu.pipeline_mode<synchronous>, transform_indices = @transform_3, window_bounds = array<i64: 1, 128>}, {pipeline_mode = #tpu.pipeline_mode<synchronous>, transform_indices = @transform_4, window_bounds = array<i64: 128, 128>}, {pipeline_mode = #tpu.pipeline_mode<synchronous>, transform_indices = @transform_5, window_bounds = array<i64: 1, 128>}, {pipeline_mode = #tpu.pipeline_mode<synchronous>, transform_indices = @transform_6, window_bounds = array<i64: 16, 128>}]} {
    %c0 = arith.constant 0 : index
    %c0_0 = arith.constant 0 : index
    %0 = vector.load %arg1[%c0, %c0_0] : memref<16x8xi32, #tpu.memory_space<vmem>>, vector<16x8xi32>
    %1 = tpu.iota {dimensions = array<i32: 1>} : vector<16x128xi32>
    %cst = arith.constant 0.000000e+00 : bf16
    %2 = vector.broadcast %cst : bf16 to vector<16x128xbf16>
    %3 = vector.extract_strided_slice %0 {offsets = [0, 0], sizes = [16, 1], strides = [1, 1]} : vector<16x8xi32> to vector<16x1xi32>
    %4 = vector.broadcast %3 : vector<16x1xi32> to vector<16x128xi32>
    %5 = arith.cmpi eq, %1, %4 : vector<16x128xi32>
    %6 = arith.extui %5 : vector<16x128xi1> to vector<16x128xi32>
    %7 = arith.sitofp %6 : vector<16x128xi32> to vector<16x128xf32>
    %8 = arith.truncf %7 : vector<16x128xf32> to vector<16x128xbf16>
    %9 = arith.addf %2, %8 : vector<16x128xbf16>
    %10 = vector.extract_strided_slice %0 {offsets = [0, 1], sizes = [16, 1], strides = [1, 1]} : vector<16x8xi32> to vector<16x1xi32>
    %11 = vector.broadcast %10 : vector<16x1xi32> to vector<16x128xi32>
    %12 = arith.cmpi eq, %1, %11 : vector<16x128xi32>
    %13 = arith.extui %12 : vector<16x128xi1> to vector<16x128xi32>
    %14 = arith.sitofp %13 : vector<16x128xi32> to vector<16x128xf32>
    %15 = arith.truncf %14 : vector<16x128xf32> to vector<16x128xbf16>
    %16 = arith.addf %9, %15 : vector<16x128xbf16>
    %17 = vector.extract_strided_slice %0 {offsets = [0, 2], sizes = [16, 1], strides = [1, 1]} : vector<16x8xi32> to vector<16x1xi32>
    %18 = vector.broadcast %17 : vector<16x1xi32> to vector<16x128xi32>
    %19 = arith.cmpi eq, %1, %18 : vector<16x128xi32>
    %20 = arith.extui %19 : vector<16x128xi1> to vector<16x128xi32>
    %21 = arith.sitofp %20 : vector<16x128xi32> to vector<16x128xf32>
    %22 = arith.truncf %21 : vector<16x128xf32> to vector<16x128xbf16>
    %23 = arith.addf %16, %22 : vector<16x128xbf16>
    %24 = vector.extract_strided_slice %0 {offsets = [0, 3], sizes = [16, 1], strides = [1, 1]} : vector<16x8xi32> to vector<16x1xi32>
    %25 = vector.broadcast %24 : vector<16x1xi32> to vector<16x128xi32>
    %26 = arith.cmpi eq, %1, %25 : vector<16x128xi32>
    %27 = arith.extui %26 : vector<16x128xi1> to vector<16x128xi32>
    %28 = arith.sitofp %27 : vector<16x128xi32> to vector<16x128xf32>
    %29 = arith.truncf %28 : vector<16x128xf32> to vector<16x128xbf16>
    %30 = arith.addf %23, %29 : vector<16x128xbf16>
    %31 = vector.extract_strided_slice %0 {offsets = [0, 4], sizes = [16, 1], strides = [1, 1]} : vector<16x8xi32> to vector<16x1xi32>
    %32 = vector.broadcast %31 : vector<16x1xi32> to vector<16x128xi32>
    %33 = arith.cmpi eq, %1, %32 : vector<16x128xi32>
    %34 = arith.extui %33 : vector<16x128xi1> to vector<16x128xi32>
    %35 = arith.sitofp %34 : vector<16x128xi32> to vector<16x128xf32>
    %36 = arith.truncf %35 : vector<16x128xf32> to vector<16x128xbf16>
    %37 = arith.addf %30, %36 : vector<16x128xbf16>
    %38 = vector.extract_strided_slice %0 {offsets = [0, 5], sizes = [16, 1], strides = [1, 1]} : vector<16x8xi32> to vector<16x1xi32>
    %39 = vector.broadcast %38 : vector<16x1xi32> to vector<16x128xi32>
    %40 = arith.cmpi eq, %1, %39 : vector<16x128xi32>
    %41 = arith.extui %40 : vector<16x128xi1> to vector<16x128xi32>
    %42 = arith.sitofp %41 : vector<16x128xi32> to vector<16x128xf32>
    %43 = arith.truncf %42 : vector<16x128xf32> to vector<16x128xbf16>
    %44 = arith.addf %37, %43 : vector<16x128xbf16>
    %45 = vector.extract_strided_slice %0 {offsets = [0, 6], sizes = [16, 1], strides = [1, 1]} : vector<16x8xi32> to vector<16x1xi32>
    %46 = vector.broadcast %45 : vector<16x1xi32> to vector<16x128xi32>
    %47 = arith.cmpi eq, %1, %46 : vector<16x128xi32>
    %48 = arith.extui %47 : vector<16x128xi1> to vector<16x128xi32>
    %49 = arith.sitofp %48 : vector<16x128xi32> to vector<16x128xf32>
    %50 = arith.truncf %49 : vector<16x128xf32> to vector<16x128xbf16>
    %51 = arith.addf %44, %50 : vector<16x128xbf16>
    %52 = vector.extract_strided_slice %0 {offsets = [0, 7], sizes = [16, 1], strides = [1, 1]} : vector<16x8xi32> to vector<16x1xi32>
    %53 = vector.broadcast %52 : vector<16x1xi32> to vector<16x128xi32>
    %54 = arith.cmpi eq, %1, %53 : vector<16x128xi32>
    %55 = arith.extui %54 : vector<16x128xi1> to vector<16x128xi32>
    %56 = arith.sitofp %55 : vector<16x128xi32> to vector<16x128xf32>
    %57 = arith.truncf %56 : vector<16x128xf32> to vector<16x128xbf16>
    %58 = arith.addf %51, %57 : vector<16x128xbf16>
    %c0_1 = arith.constant 0 : index
    %c0_2 = arith.constant 0 : index
    %59 = vector.load %arg2[%c0_1, %c0_2] : memref<128x128xbf16, #tpu.memory_space<vmem>>, vector<128x128xbf16>
    %cst_3 = arith.constant dense<0.000000e+00> : vector<16x128xf32>
    %60 = tpu.matmul %58, %59, %cst_3 {dimension_numbers = #tpu.dot_dimension_numbers<[1], [0], [0], [1], [0, 0, 1, 1], [], []>} : vector<16x128xbf16>, vector<128x128xbf16>, vector<16x128xf32> -> vector<16x128xf32>
    %cst_4 = arith.constant 1.250000e-01 : f32
    %61 = vector.broadcast %cst_4 : f32 to vector<16x128xf32>
    %62 = arith.mulf %60, %61 : vector<16x128xf32>
    %63 = arith.truncf %62 : vector<16x128xf32> to vector<16x128xbf16>
    %c0_5 = arith.constant 0 : index
    %c0_6 = arith.constant 0 : index
    %64 = vector.load %arg3[%c0_5, %c0_6] : memref<128x128xbf16, #tpu.memory_space<vmem>>, vector<128x128xbf16>
    %cst_7 = arith.constant dense<0.000000e+00> : vector<16x128xf32>
    %65 = tpu.matmul %63, %64, %cst_7 {dimension_numbers = #tpu.dot_dimension_numbers<[1], [0], [0], [1], [0, 0, 1, 1], [], []>} : vector<16x128xbf16>, vector<128x128xbf16>, vector<16x128xf32> -> vector<16x128xf32>
    %c0_8 = arith.constant 0 : index
    %c0_9 = arith.constant 0 : index
    %66 = vector.load %arg4[%c0_8, %c0_9] : memref<1x128xf32, #tpu.memory_space<vmem>>, vector<1x128xf32>
    %67 = vector.broadcast %66 : vector<1x128xf32> to vector<16x128xf32>
    %68 = arith.addf %65, %67 : vector<16x128xf32>
    %69 = math.tanh %68 : vector<16x128xf32>
    %70 = arith.truncf %69 : vector<16x128xf32> to vector<16x128xbf16>
    %c0_10 = arith.constant 0 : index
    %c0_11 = arith.constant 0 : index
    %71 = vector.load %arg5[%c0_10, %c0_11] : memref<128x128xbf16, #tpu.memory_space<vmem>>, vector<128x128xbf16>
    %cst_12 = arith.constant dense<0.000000e+00> : vector<16x128xf32>
    %72 = tpu.matmul %70, %71, %cst_12 {dimension_numbers = #tpu.dot_dimension_numbers<[1], [0], [0], [1], [0, 0, 1, 1], [], []>} : vector<16x128xbf16>, vector<128x128xbf16>, vector<16x128xf32> -> vector<16x128xf32>
    %c0_13 = arith.constant 0 : index
    %c0_14 = arith.constant 0 : index
    %73 = vector.load %arg6[%c0_13, %c0_14] : memref<1x128xf32, #tpu.memory_space<vmem>>, vector<1x128xf32>
    %74 = vector.broadcast %73 : vector<1x128xf32> to vector<16x128xf32>
    %75 = arith.addf %72, %74 : vector<16x128xf32>
    %c0_15 = arith.constant 0 : index
    %c0_16 = arith.constant 0 : index
    %76 = vector.load %arg7[%c0_15, %c0_16] : memref<16x128xf32, #tpu.memory_space<vmem>>, vector<16x128xf32>
    tpu.vector_store %arg7[%c0_15, %c0_16], %75 {strides = array<i32>} : memref<16x128xf32, #tpu.memory_space<vmem>>, vector<16x128xf32>,
    return
  }
  func.func @transform_0(%arg0: i32) -> (i32, i32) {
    %c0_i32 = arith.constant 0 : i32
    %c0_i32_0 = arith.constant 0 : i32
    %c0_i32_1 = arith.constant 0 : i32
    return %c0_i32, %c0_i32_0 : i32, i32
  }
  func.func @transform_1(%arg0: i32) -> (i32, i32) {
    %c0_i32 = arith.constant 0 : i32
    %c0_i32_0 = arith.constant 0 : i32
    %c0_i32_1 = arith.constant 0 : i32
    return %c0_i32, %c0_i32_0 : i32, i32
  }
  func.func @transform_2(%arg0: i32) -> (i32, i32) {
    %c0_i32 = arith.constant 0 : i32
    %c0_i32_0 = arith.constant 0 : i32
    %c0_i32_1 = arith.constant 0 : i32
    return %c0_i32, %c0_i32_0 : i32, i32
  }
  func.func @transform_3(%arg0: i32) -> (i32, i32) {
    %c0_i32 = arith.constant 0 : i32
    %c0_i32_0 = arith.constant 0 : i32
    %c0_i32_1 = arith.constant 0 : i32
    return %c0_i32, %c0_i32_0 : i32, i32
  }
  func.func @transform_4(%arg0: i32) -> (i32, i32) {
    %c0_i32 = arith.constant 0 : i32
    %c0_i32_0 = arith.constant 0 : i32
    %c0_i32_1 = arith.constant 0 : i32
    return %c0_i32, %c0_i32_0 : i32, i32
  }
  func.func @transform_5(%arg0: i32) -> (i32, i32) {
    %c0_i32 = arith.constant 0 : i32
    %c0_i32_0 = arith.constant 0 : i32
    %c0_i32_1 = arith.constant 0 : i32
    return %c0_i32, %c0_i32_0 : i32, i32
  }
  func.func @transform_6(%arg0: i32) -> (i32, i32) {
    %c0_i32 = arith.constant 0 : i32
    %c0_i32_0 = arith.constant 0 : i32
    %c0_i32_1 = arith.constant 0 : i32
    return %c0_i32, %c0_i32_0 : i32, i32
  }
}

</mosaic_0001>

<llo_original>
// kernel: tegl_forward.1
$region0: #{tegl_forward.1}
  #allocation0 [shape = 'u32[]', space=smem, size = 0x4, offset = 0x4, fixed_abs, tag = 'smem constant byte address 0x4 - core index']
  #allocation1 [shape = 'u32[144,128]{1,0:T(1,128)}', space=vmem, size = 0x12000, scoped, tag = 'internal scratch']
  %s0 = inlined_call_operand.vmem [shape: s32[16,8], index: 0, kind: input, shape index: {}]
  %s1 = inlined_call_operand.hbm [shape: bf16[128,128], index: 1, kind: input, shape index: {}]
  %s2 = inlined_call_operand.hbm [shape: bf16[128,128], index: 2, kind: input, shape index: {}]
  %s3 = inlined_call_operand.vmem [shape: f32[1,128], index: 3, kind: input, shape index: {}]
  %s4 = inlined_call_operand.hbm [shape: bf16[128,128], index: 4, kind: input, shape index: {}]
  %s5 = inlined_call_operand.vmem [shape: f32[1,128], index: 5, kind: input, shape index: {}]
  %s6 = inlined_call_operand.hbm [shape: f32[16,128], index: 6, kind: output, shape index: {}]
  %s7 = sld [smem:[#allocation0]]
  $region46: #{tegl_forward.1} parent=0
    _
  %s9 = ssub.s32 1, %s7
  %s10 = scalar_select 0, %s9, %s7
  $region1: #{tegl_forward.1} parent=0
    #allocation2 [shape = 'u8[32768]{0}', space=vmem, size = 0x8000, scoped, tag = 'input window, operand 1, single buffered']
    #allocation3 [shape = 's32[1]{0}', space=sflag, size = 0x4, scoped, tag = 'scoped memory for tegl_forward.1']
    #allocation4 [shape = 's32[1]{0}', space=sflag, size = 0x4, scoped, tag = 'scoped memory for tegl_forward.1']
    #allocation5 [shape = 'u8[32768]{0}', space=vmem, size = 0x8000, scoped, tag = 'input window, operand 2, single buffered']
    #allocation6 [shape = 's32[1]{0}', space=sflag, size = 0x4, scoped, tag = 'scoped memory for tegl_forward.1']
    #allocation7 [shape = 'u8[32768]{0}', space=vmem, size = 0x8000, scoped, tag = 'input window, operand 4, single buffered']
    #allocation8 [shape = 'u8[8192]{0}', space=vmem, size = 0x2000, scoped, tag = 'output window, operand 0, single buffered']
    %11 = vsyncpa [#allocation3], 0
    %12 = vsyncpa [#allocation6], 0
    %13 = vsyncpa [#allocation4], 0
    // Predicated region
    $region2: #{tegl_forward.1} parent=1 // pred_check
      _
    $region3: #{tegl_forward.1} parent=1 // pred_check_branch
      %15 = sbr.rel (0) target = $region5
    $region4: #{tegl_forward.1} parent=1 // pred_region
      _
    $region5: #{tegl_forward.1} parent=1 // pred_fallthru
      _
    // Predicated region
    $region6: #{tegl_forward.1} parent=1 // pred_check
      _
    $region7: #{tegl_forward.1} parent=1 // pred_check_branch
      %17 = sbr.rel (0) target = $region9
    $region8: #{tegl_forward.1} parent=1 // pred_region
      %s19 = ssub.s32 1024, 1024
      %20 = vsyncadd [#allocation3], %s19
      %s21 = sshll.u32 [#allocation2], 4
      %s22 = int_to_ptr.vmem [resolvable:$true] %s21
      %27 = dma.hbm_to_vmem [thread:$0]  %s1, 1024, %s22, [#allocation3], 64, 64, 4
    $region9: #{tegl_forward.1} parent=1 // pred_fallthru
      _
    // Predicated region
    $region10: #{tegl_forward.1} parent=1 // pred_check
      _
    $region11: #{tegl_forward.1} parent=1 // pred_check_branch
      %29 = sbr.rel (0) target = $region13
    $region12: #{tegl_forward.1} parent=1 // pred_region
      %s31 = ssub.s32 1024, 1024
      %32 = vsyncadd [#allocation6], %s31
      %s33 = sshll.u32 [#allocation5], 4
      %s34 = int_to_ptr.vmem [resolvable:$true] %s33
      %39 = dma.hbm_to_vmem [thread:$0]  %s2, 1024, %s34, [#allocation6], 64, 64, 4
    $region13: #{tegl_forward.1} parent=1 // pred_fallthru
      _
    // Predicated region
    $region14: #{tegl_forward.1} parent=1 // pred_check
      _
    $region15: #{tegl_forward.1} parent=1 // pred_check_branch
      %41 = sbr.rel (0) target = $region17
    $region16: #{tegl_forward.1} parent=1 // pred_region
      _
    $region17: #{tegl_forward.1} parent=1 // pred_fallthru
      _
    // Predicated region
    $region18: #{tegl_forward.1} parent=1 // pred_check
      _
    $region19: #{tegl_forward.1} parent=1 // pred_check_branch
      %43 = sbr.rel (0) target = $region21
    $region20: #{tegl_forward.1} parent=1 // pred_region
      %s45 = ssub.s32 1024, 1024
      %46 = vsyncadd [#allocation6], %s45
      %s47 = sshll.u32 [#allocation7], 4
      %s48 = int_to_ptr.vmem [resolvable:$true] %s47
      %53 = dma.hbm_to_vmem [thread:$0]  %s4, 1024, %s48, [#allocation6], 64, 64, 4
    $region21: #{tegl_forward.1} parent=1 // pred_fallthru
      _
    // Predicated region
    $region22: #{tegl_forward.1} parent=1 // pred_check
      _
    $region23: #{tegl_forward.1} parent=1 // pred_check_branch
      %55 = sbr.rel (0) target = $region25
    $region24: #{tegl_forward.1} parent=1 // pred_region
      _
    $region25: #{tegl_forward.1} parent=1 // pred_fallthru
      _
    // Predicated region
    $region26: #{tegl_forward.1} parent=1 // pred_check
      _
    $region27: #{tegl_forward.1} parent=1 // pred_check_branch
      %57 = sbr.rel (0) target = $region29
    $region28: #{tegl_forward.1} parent=1 // pred_region
      %58 = dma.done [#allocation3], 1024
    $region29: #{tegl_forward.1} parent=1 // pred_fallthru
      _
    // Predicated region
    $region30: #{tegl_forward.1} parent=1 // pred_check
      _
    $region31: #{tegl_forward.1} parent=1 // pred_check_branch
      %60 = sbr.rel (0) target = $region33
    $region32: #{tegl_forward.1} parent=1 // pred_region
      %61 = dma.done [#allocation6], 1024
    $region33: #{tegl_forward.1} parent=1 // pred_fallthru
      _
    // Predicated region
    $region34: #{tegl_forward.1} parent=1 // pred_check
      _
    $region35: #{tegl_forward.1} parent=1 // pred_check_branch
      %63 = sbr.rel (0) target = $region37
    $region36: #{tegl_forward.1} parent=1 // pred_region
      %64 = dma.done [#allocation6], 1024
    $region37: #{tegl_forward.1} parent=1 // pred_fallthru
      _
    %v66 = vld [vmem:[%s0] sm:$0xff]
    %v67 = vld [vmem:[%s0 + $0x8] sm:$0xff]
    %v68 = vlaneseq
    %v69 = vand.u32 %v68, 127
    %70 = vset.pattern.permute.xlu0 0
    %71 = vperm.xlu0 %70, %v66
    %v72 = vpop.permute.xlu0 %71
    %73 = vset.pattern.permute.xlu0 0
    %74 = vperm.xlu0 %73, %v67
    %v75 = vpop.permute.xlu0 %74
    %vm76 = vcmp.eq.s32.totalorder %v69, %v72
    %vm77 = vcmp.eq.s32.totalorder %v69, %v75
    %v78 = vsel %vm76, 1, 0
    %v79 = vsel %vm77, 1, 0
    %v80 = vcvt.s32.f32 %v78
    %v81 = vcvt.s32.f32 %v79
    %v82 = vpack.c.bf16 %v81, %v80
    %v83 = vadd.bf16 %v82, 0
    %84 = vset.pattern.permute.xlu0 1
    %85 = vperm.xlu0 %84, %v66
    %v86 = vpop.permute.xlu0 %85
    %87 = vset.pattern.permute.xlu0 1
    %88 = vperm.xlu0 %87, %v67
    %v89 = vpop.permute.xlu0 %88
    %vm90 = vcmp.eq.s32.totalorder %v69, %v86
    %vm91 = vcmp.eq.s32.totalorder %v69, %v89
    %v92 = vsel %vm90, 1, 0
    %v93 = vsel %vm91, 1, 0
    %v94 = vcvt.s32.f32 %v92
    %v95 = vcvt.s32.f32 %v93
    %v96 = vpack.c.bf16 %v95, %v94
    %v97 = vadd.bf16 %v83, %v96
    %98 = vset.pattern.permute.xlu0 2
    %99 = vperm.xlu0 %98, %v66
    %v100 = vpop.permute.xlu0 %99
    %101 = vset.pattern.permute.xlu0 2
    %102 = vperm.xlu0 %101, %v67
    %v103 = vpop.permute.xlu0 %102
    %vm104 = vcmp.eq.s32.totalorder %v69, %v100
    %vm105 = vcmp.eq.s32.totalorder %v69, %v103
    %v106 = vsel %vm104, 1, 0
    %v107 = vsel %vm105, 1, 0
    %v108 = vcvt.s32.f32 %v106
    %v109 = vcvt.s32.f32 %v107
    %v110 = vpack.c.bf16 %v109, %v108
    %v111 = vadd.bf16 %v97, %v110
    %112 = vset.pattern.permute.xlu0 3
    %113 = vperm.xlu0 %112, %v66
    %v114 = vpop.permute.xlu0 %113
    %115 = vset.pattern.permute.xlu0 3
    %116 = vperm.xlu0 %115, %v67
    %v117 = vpop.permute.xlu0 %116
    %vm118 = vcmp.eq.s32.totalorder %v69, %v114
    %vm119 = vcmp.eq.s32.totalorder %v69, %v117
    %v120 = vsel %vm118, 1, 0
    %v121 = vsel %vm119, 1, 0
    %v122 = vcvt.s32.f32 %v120
    %v123 = vcvt.s32.f32 %v121
    %v124 = vpack.c.bf16 %v123, %v122
    %v125 = vadd.bf16 %v111, %v124
    %126 = vset.pattern.permute.xlu0 4
    %127 = vperm.xlu0 %126, %v66
    %v128 = vpop.permute.xlu0 %127
    %129 = vset.pattern.permute.xlu0 4
    %130 = vperm.xlu0 %129, %v67
    %v131 = vpop.permute.xlu0 %130
    %vm132 = vcmp.eq.s32.totalorder %v69, %v128
    %vm133 = vcmp.eq.s32.totalorder %v69, %v131
    %v134 = vsel %vm132, 1, 0
    %v135 = vsel %vm133, 1, 0
    %v136 = vcvt.s32.f32 %v134
    %v137 = vcvt.s32.f32 %v135
    %v138 = vpack.c.bf16 %v137, %v136
    %v139 = vadd.bf16 %v125, %v138
    %140 = vset.pattern.permute.xlu0 5
    %141 = vperm.xlu0 %140, %v66
    %v142 = vpop.permute.xlu0 %141
    %143 = vset.pattern.permute.xlu0 5
    %144 = vperm.xlu0 %143, %v67
    %v145 = vpop.permute.xlu0 %144
    %vm146 = vcmp.eq.s32.totalorder %v69, %v142
    %vm147 = vcmp.eq.s32.totalorder %v69, %v145
    %v148 = vsel %vm146, 1, 0
    %v149 = vsel %vm147, 1, 0
    %v150 = vcvt.s32.f32 %v148
    %v151 = vcvt.s32.f32 %v149
    %v152 = vpack.c.bf16 %v151, %v150
    %v153 = vadd.bf16 %v139, %v152
    %154 = vset.pattern.permute.xlu0 6
    %155 = vperm.xlu0 %154, %v66
    %v156 = vpop.permute.xlu0 %155
    %157 = vset.pattern.permute.xlu0 6
    %158 = vperm.xlu0 %157, %v67
    %v159 = vpop.permute.xlu0 %158
    %vm160 = vcmp.eq.s32.totalorder %v69, %v156
    %vm161 = vcmp.eq.s32.totalorder %v69, %v159
    %v162 = vsel %vm160, 1, 0
    %v163 = vsel %vm161, 1, 0
    %v164 = vcvt.s32.f32 %v162
    %v165 = vcvt.s32.f32 %v163
    %v166 = vpack.c.bf16 %v165, %v164
    %v167 = vadd.bf16 %v153, %v166
    %168 = vset.pattern.permute.xlu0 7
    %169 = vperm.xlu0 %168, %v66
    %v170 = vpop.permute.xlu0 %169
    %171 = vset.pattern.permute.xlu0 7
    %172 = vperm.xlu0 %171, %v67
    %v173 = vpop.permute.xlu0 %172
    %vm174 = vcmp.eq.s32.totalorder %v69, %v170
    %vm175 = vcmp.eq.s32.totalorder %v69, %v173
    %v176 = vsel %vm174, 1, 0
    %v177 = vsel %vm175, 1, 0
    %v178 = vcvt.s32.f32 %v176
    %v179 = vcvt.s32.f32 %v177
    %v180 = vpack.c.bf16 %v179, %v178
    %v181 = vadd.bf16 %v167, %v180
    %v182 = vld [vmem:[#allocation2] sm:$0xf]
    %v183 = vld [vmem:[#allocation2 + $0x4] sm:$0xf]
    %v184 = vld [vmem:[#allocation2 + $0x8] sm:$0xf]
    %v185 = vld [vmem:[#allocation2 + $0xc] sm:$0xf]
    %v186 = vld [vmem:[#allocation2 + $0x10] sm:$0xf]
    %v187 = vld [vmem:[#allocation2 + $0x14] sm:$0xf]
    %v188 = vld [vmem:[#allocation2 + $0x18] sm:$0xf]
    %v189 = vld [vmem:[#allocation2 + $0x1c] sm:$0xf]
    %v190 = vld [vmem:[#allocation2 + $0x20] sm:$0xf]
    %v191 = vld [vmem:[#allocation2 + $0x24] sm:$0xf]
    %v192 = vld [vmem:[#allocation2 + $0x28] sm:$0xf]
    %v193 = vld [vmem:[#allocation2 + $0x2c] sm:$0xf]
    %v194 = vld [vmem:[#allocation2 + $0x30] sm:$0xf]
    %v195 = vld [vmem:[#allocation2 + $0x34] sm:$0xf]
    %v196 = vld [vmem:[#allocation2 + $0x38] sm:$0xf]
    %v197 = vld [vmem:[#allocation2 + $0x3c] sm:$0xf]
    %v214 = vunpack.c.l.b16 %v182
    %v215 = vunpack.c.l.b16 %v183
    %v216 = vunpack.c.l.b16 %v184
    %v217 = vunpack.c.l.b16 %v185
    %v218 = vunpack.c.l.b16 %v186
    %v219 = vunpack.c.l.b16 %v187
    %v220 = vunpack.c.l.b16 %v188
    %v221 = vunpack.c.l.b16 %v189
    %v222 = vunpack.c.l.b16 %v190
    %v223 = vunpack.c.l.b16 %v191
    %v224 = vunpack.c.l.b16 %v192
    %v225 = vunpack.c.l.b16 %v193
    %v226 = vunpack.c.l.b16 %v194
    %v227 = vunpack.c.l.b16 %v195
    %v228 = vunpack.c.l.b16 %v196
    %v229 = vunpack.c.l.b16 %v197
    %v230 = vpack.c.b16 %v215, %v214
    %v231 = vpack.c.b16 %v217, %v216
    %v232 = vpack.c.b16 %v219, %v218
    %v233 = vpack.c.b16 %v221, %v220
    %v234 = vpack.c.b16 %v223, %v222
    %v235 = vpack.c.b16 %v225, %v224
    %v236 = vpack.c.b16 %v227, %v226
    %v237 = vpack.c.b16 %v229, %v228
    %246 = vmatprep.subr.bf16.mxu0 0
    %247 = vmatpush1.bf16.msra.mxu0 %v230
    %248 = vmatprep.subr.bf16.mxu0 0
    %249 = vmatpush1.bf16.msra.mxu0 %v231
    %250 = vmatprep.subr.bf16.mxu0 0
    %251 = vmatpush1.bf16.msra.mxu0 %v232
    %252 = vmatprep.subr.bf16.mxu0 0
    %253 = vmatpush1.bf16.msra.mxu0 %v233
    %254 = vmatprep.subr.bf16.mxu0 0
    %255 = vmatpush1.bf16.msra.mxu0 %v234
    %256 = vmatprep.subr.bf16.mxu0 0
    %257 = vmatpush1.bf16.msra.mxu0 %v235
    %258 = vmatprep.subr.bf16.mxu0 0
    %259 = vmatpush1.bf16.msra.mxu0 %v236
    %260 = vmatprep.subr.bf16.mxu0 0
    %261 = vmatpush1.bf16.msra.mxu0 %v237
    %262 = vmatprep.subr.bf16.mxu0 0
    %263 = vmatpush1.bf16.msra.mxu0 0
    %264 = vmatprep.subr.bf16.mxu0 0
    %265 = vmatpush1.bf16.msra.mxu0 0
    %266 = vmatprep.subr.bf16.mxu0 0
    %267 = vmatpush1.bf16.msra.mxu0 0
    %268 = vmatprep.subr.bf16.mxu0 0
    %269 = vmatpush1.bf16.msra.mxu0 0
    %270 = vmatprep.subr.bf16.mxu0 0
    %271 = vmatpush1.bf16.msra.mxu0 0
    %272 = vmatprep.subr.bf16.mxu0 0
    %273 = vmatpush1.bf16.msra.mxu0 0
    %274 = vmatprep.subr.bf16.mxu0 0
    %275 = vmatpush1.bf16.msra.mxu0 0
    %276 = vmatprep.subr.bf16.mxu0 0
    %277 = vmatpush1.bf16.msra.mxu0 0
    %278 = vmatprep.mubr.bf16.mxu0 0
    %279 = vmatmul.mubr.bf16.gmra.mrb[0].mxu0 %v181
    %v280 = vpop.f32.mrb[0].mxu0
    %v281 = vadd.f32 0.0, %v280
    %v282 = vpop.f32.mrb[0].mxu0
    %v283 = vpop.f32.mrb[0].mxu0
    %v284 = vadd.f32 0.0, %v283
    %v285 = vpop.f32.mrb[0].mxu0
    %286 = vdwg.mxu0
    %v287 = vmul.f32 %v281, 0.125
    %v288 = vmul.f32 %v284, 0.125
    %v289 = vpack.c.bf16 %v288, %v287
    %v290 = vld [vmem:[#allocation5] sm:$0xf]
    %v291 = vld [vmem:[#allocation5 + $0x4] sm:$0xf]
    %v292 = vld [vmem:[#allocation5 + $0x8] sm:$0xf]
    %v293 = vld [vmem:[#allocation5 + $0xc] sm:$0xf]
    %v294 = vld [vmem:[#allocation5 + $0x10] sm:$0xf]
    %v295 = vld [vmem:[#allocation5 + $0x14] sm:$0xf]
    %v296 = vld [vmem:[#allocation5 + $0x18] sm:$0xf]
    %v297 = vld [vmem:[#allocation5 + $0x1c] sm:$0xf]
    %v298 = vld [vmem:[#allocation5 + $0x20] sm:$0xf]
    %v299 = vld [vmem:[#allocation5 + $0x24] sm:$0xf]
    %v300 = vld [vmem:[#allocation5 + $0x28] sm:$0xf]
    %v301 = vld [vmem:[#allocation5 + $0x2c] sm:$0xf]
    %v302 = vld [vmem:[#allocation5 + $0x30] sm:$0xf]
    %v303 = vld [vmem:[#allocation5 + $0x34] sm:$0xf]
    %v304 = vld [vmem:[#allocation5 + $0x38] sm:$0xf]
    %v305 = vld [vmem:[#allocation5 + $0x3c] sm:$0xf]
    %v306 = vld [vmem:[%s3] sm:$0x1]
    %v308 = vlaneseq
    %v309 = vshrl.u32 %v308, 7
    %v310 = vsub.s32 0, %v309
    %v311 = vrot.slane %v306, %v310
    %v329 = vunpack.c.l.b16 %v290
    %v330 = vunpack.c.l.b16 %v291
    %v331 = vunpack.c.l.b16 %v292
    %v332 = vunpack.c.l.b16 %v293
    %v333 = vunpack.c.l.b16 %v294
    %v334 = vunpack.c.l.b16 %v295
    %v335 = vunpack.c.l.b16 %v296
    %v336 = vunpack.c.l.b16 %v297
    %v337 = vunpack.c.l.b16 %v298
    %v338 = vunpack.c.l.b16 %v299
    %v339 = vunpack.c.l.b16 %v300
    %v340 = vunpack.c.l.b16 %v301
    %v341 = vunpack.c.l.b16 %v302
    %v342 = vunpack.c.l.b16 %v303
    %v343 = vunpack.c.l.b16 %v304
    %v344 = vunpack.c.l.b16 %v305
    %v345 = vpack.c.b16 %v330, %v329
    %v346 = vpack.c.b16 %v332, %v331
    %v347 = vpack.c.b16 %v334, %v333
    %v348 = vpack.c.b16 %v336, %v335
    %v349 = vpack.c.b16 %v338, %v337
    %v350 = vpack.c.b16 %v340, %v339
    %v351 = vpack.c.b16 %v342, %v341
    %v352 = vpack.c.b16 %v344, %v343
    %361 = vmatprep.subr.bf16.mxu0 0
    %362 = vmatpush1.bf16.msra.mxu0 %v345
    %363 = vmatprep.subr.bf16.mxu0 0
    %364 = vmatpush1.bf16.msra.mxu0 %v346
    %365 = vmatprep.subr.bf16.mxu0 0
    %366 = vmatpush1.bf16.msra.mxu0 %v347
    %367 = vmatprep.subr.bf16.mxu0 0
    %368 = vmatpush1.bf16.msra.mxu0 %v348
    %369 = vmatprep.subr.bf16.mxu0 0
    %370 = vmatpush1.bf16.msra.mxu0 %v349
    %371 = vmatprep.subr.bf16.mxu0 0
    %372 = vmatpush1.bf16.msra.mxu0 %v350
    %373 = vmatprep.subr.bf16.mxu0 0
    %374 = vmatpush1.bf16.msra.mxu0 %v351
    %375 = vmatprep.subr.bf16.mxu0 0
    %376 = vmatpush1.bf16.msra.mxu0 %v352
    %377 = vmatprep.subr.bf16.mxu0 0
    %378 = vmatpush1.bf16.msra.mxu0 0
    %379 = vmatprep.subr.bf16.mxu0 0
    %380 = vmatpush1.bf16.msra.mxu0 0
    %381 = vmatprep.subr.bf16.mxu0 0
    %382 = vmatpush1.bf16.msra.mxu0 0
    %383 = vmatprep.subr.bf16.mxu0 0
    %384 = vmatpush1.bf16.msra.mxu0 0
    %385 = vmatprep.subr.bf16.mxu0 0
    %386 = vmatpush1.bf16.msra.mxu0 0
    %387 = vmatprep.subr.bf16.mxu0 0
    %388 = vmatpush1.bf16.msra.mxu0 0
    %389 = vmatprep.subr.bf16.mxu0 0
    %390 = vmatpush1.bf16.msra.mxu0 0
    %391 = vmatprep.subr.bf16.mxu0 0
    %392 = vmatpush1.bf16.msra.mxu0 0
    %393 = vmatprep.mubr.bf16.mxu0 0
    %394 = vmatmul.mubr.bf16.gmra.mrb[0].mxu0 %v289
    %v395 = vpop.f32.mrb[0].mxu0
    %v396 = vadd.f32 %v311, %v395
    %v397 = vpop.f32.mrb[0].mxu0
    %v398 = vpop.f32.mrb[0].mxu0
    %v399 = vadd.f32 %v311, %v398
    %v400 = vpop.f32.mrb[0].mxu0
    %401 = vdwg.mxu0
    %v402 = vtanh.pop %v396
    %v403 = vtanh.pop %v399
    %v404 = vpack.c.bf16 %v403, %v402
    %v405 = vld [vmem:[#allocation7] sm:$0xf]
    %v406 = vld [vmem:[#allocation7 + $0x4] sm:$0xf]
    %v407 = vld [vmem:[#allocation7 + $0x8] sm:$0xf]
    %v408 = vld [vmem:[#allocation7 + $0xc] sm:$0xf]
    %v409 = vld [vmem:[#allocation7 + $0x10] sm:$0xf]
    %v410 = vld [vmem:[#allocation7 + $0x14] sm:$0xf]
    %v411 = vld [vmem:[#allocation7 + $0x18] sm:$0xf]
    %v412 = vld [vmem:[#allocation7 + $0x1c] sm:$0xf]
    %v413 = vld [vmem:[#allocation7 + $0x20] sm:$0xf]
    %v414 = vld [vmem:[#allocation7 + $0x24] sm:$0xf]
    %v415 = vld [vmem:[#allocation7 + $0x28] sm:$0xf]
    %v416 = vld [vmem:[#allocation7 + $0x2c] sm:$0xf]
    %v417 = vld [vmem:[#allocation7 + $0x30] sm:$0xf]
    %v418 = vld [vmem:[#allocation7 + $0x34] sm:$0xf]
    %v419 = vld [vmem:[#allocation7 + $0x38] sm:$0xf]
    %v420 = vld [vmem:[#allocation7 + $0x3c] sm:$0xf]
    %v421 = vld [vmem:[%s5] sm:$0x1]
    %v423 = vlaneseq
    %v424 = vshrl.u32 %v423, 7
    %v425 = vsub.s32 0, %v424
    %v426 = vrot.slane %v421, %v425
    %v444 = vunpack.c.l.b16 %v405
    %v445 = vunpack.c.l.b16 %v406
    %v446 = vunpack.c.l.b16 %v407
    %v447 = vunpack.c.l.b16 %v408
    %v448 = vunpack.c.l.b16 %v409
    %v449 = vunpack.c.l.b16 %v410
    %v450 = vunpack.c.l.b16 %v411
    %v451 = vunpack.c.l.b16 %v412
    %v452 = vunpack.c.l.b16 %v413
    %v453 = vunpack.c.l.b16 %v414
    %v454 = vunpack.c.l.b16 %v415
    %v455 = vunpack.c.l.b16 %v416
    %v456 = vunpack.c.l.b16 %v417
    %v457 = vunpack.c.l.b16 %v418
    %v458 = vunpack.c.l.b16 %v419
    %v459 = vunpack.c.l.b16 %v420
    %v460 = vpack.c.b16 %v445, %v444
    %v461 = vpack.c.b16 %v447, %v446
    %v462 = vpack.c.b16 %v449, %v448
    %v463 = vpack.c.b16 %v451, %v450
    %v464 = vpack.c.b16 %v453, %v452
    %v465 = vpack.c.b16 %v455, %v454
    %v466 = vpack.c.b16 %v457, %v456
    %v467 = vpack.c.b16 %v459, %v458
    %476 = vmatprep.subr.bf16.mxu0 0
    %477 = vmatpush1.bf16.msra.mxu0 %v460
    %478 = vmatprep.subr.bf16.mxu0 0
    %479 = vmatpush1.bf16.msra.mxu0 %v461
    %480 = vmatprep.subr.bf16.mxu0 0
    %481 = vmatpush1.bf16.msra.mxu0 %v462
    %482 = vmatprep.subr.bf16.mxu0 0
    %483 = vmatpush1.bf16.msra.mxu0 %v463
    %484 = vmatprep.subr.bf16.mxu0 0
    %485 = vmatpush1.bf16.msra.mxu0 %v464
    %486 = vmatprep.subr.bf16.mxu0 0
    %487 = vmatpush1.bf16.msra.mxu0 %v465
    %488 = vmatprep.subr.bf16.mxu0 0
    %489 = vmatpush1.bf16.msra.mxu0 %v466
    %490 = vmatprep.subr.bf16.mxu0 0
    %491 = vmatpush1.bf16.msra.mxu0 %v467
    %492 = vmatprep.subr.bf16.mxu0 0
    %493 = vmatpush1.bf16.msra.mxu0 0
    %494 = vmatprep.subr.bf16.mxu0 0
    %495 = vmatpush1.bf16.msra.mxu0 0
    %496 = vmatprep.subr.bf16.mxu0 0
    %497 = vmatpush1.bf16.msra.mxu0 0
    %498 = vmatprep.subr.bf16.mxu0 0
    %499 = vmatpush1.bf16.msra.mxu0 0
    %500 = vmatprep.subr.bf16.mxu0 0
    %501 = vmatpush1.bf16.msra.mxu0 0
    %502 = vmatprep.subr.bf16.mxu0 0
    %503 = vmatpush1.bf16.msra.mxu0 0
    %504 = vmatprep.subr.bf16.mxu0 0
    %505 = vmatpush1.bf16.msra.mxu0 0
    %506 = vmatprep.subr.bf16.mxu0 0
    %507 = vmatpush1.bf16.msra.mxu0 0
    %508 = vmatprep.mubr.bf16.mxu0 0
    %509 = vmatmul.mubr.bf16.gmra.mrb[0].mxu0 %v404
    %v510 = vpop.f32.mrb[0].mxu0
    %v511 = vadd.f32 %v426, %v510
    %v512 = vpop.f32.mrb[0].mxu0
    %v513 = vpop.f32.mrb[0].mxu0
    %v514 = vadd.f32 %v426, %v513
    %v515 = vpop.f32.mrb[0].mxu0
    %516 = vdwg.mxu0
    %517 = vst [vmem:[#allocation8] sm:$0xff] %v511
    %518 = vst [vmem:[#allocation8 + $0x8] sm:$0xff] %v514
    // Predicated region
    $region38: #{tegl_forward.1} parent=1 // pred_check
      _
    $region39: #{tegl_forward.1} parent=1 // pred_check_branch
      %520 = sbr.rel (0) target = $region41
    $region40: #{tegl_forward.1} parent=1 // pred_region
      %s522 = ssub.s32 256, 256
      %523 = vsyncadd [#allocation4], %s522
      %s524 = sshll.u32 [#allocation8], 4
      %s525 = int_to_ptr.vmem [resolvable:$true] %s524
      %530 = dma.vmem_to_hbm [thread:$0]  %s525, 256, %s6, [#allocation4], 128, 128, 8
    $region41: #{tegl_forward.1} parent=1 // pred_fallthru
      _
    // Predicated region
    $region42: #{tegl_forward.1} parent=1 // pred_check
      _
    $region43: #{tegl_forward.1} parent=1 // pred_check_branch
      %532 = sbr.rel (0) target = $region45
    $region44: #{tegl_forward.1} parent=1 // pred_region
      %533 = dma.done [#allocation4], 256
    $region45: #{tegl_forward.1} parent=1 // pred_fallthru
      _
    %534 = vsyncpa [#allocation3], 1
    %535 = vsyncpa [#allocation6], 1
    %536 = vsyncpa [#allocation4], 1

</llo_original>
